<compile_context>
chip_gen: v5e
topology: v5e:2x2
jax: 0.10.0
libtpu: 0.0.40
codegen_flags: <defaults>
</compile_context>

<pallas_src>
import functools

import jax
import jax.numpy as jnp
from jax.experimental import pallas as pl
from jax.experimental.pallas import tpu as pltpu


def _round_up(x, m):
    return ((x + m - 1) // m) * m


# ----------------------------------------------------------------------------
# Fused kernel: hop-split frames -> (windowed) real DFT -> log-mag features ->
# MLP -> sigmoid masks, stored TRANSPOSED (frames on the lane axis).
# All intermediates stay in VMEM / vregs.
# ----------------------------------------------------------------------------
def fused_exec_kernel(a_ref, b_ref, dftw_ref, w1_ref, b1_ref, w2_ref, b2_ref,
                      m_ref, *, hop):
    # Overlapping framing folded into the matmul:
    #   frames @ dft_w == a @ dft_w[:hop] + b @ dft_w[hop:]
    # Hann window is pre-folded into dft_w; re/im halves are 128-lane aligned.
    dftw = dftw_ref[...]
    y = (jnp.dot(a_ref[...], dftw[:hop, :], preferred_element_type=jnp.float32)
         + jnp.dot(b_ref[...], dftw[hop:, :], preferred_element_type=jnp.float32))
    re = y[:, :128]                               # lane-aligned slices (free)
    im = y[:, 128:]
    mag = jnp.sqrt(re * re + im * im)             # (tm, 128); lanes >= F are 0
    f = jnp.log(mag + 1e-6)                       # log-mag features

    h = jnp.maximum(
        jnp.dot(f, w1_ref[...], preferred_element_type=jnp.float32) + b1_ref[...],
        0.0)                                      # (tm, H) ReLU
    logits = (jnp.dot(h, w2_ref[...], preferred_element_type=jnp.float32)
              + b2_ref[...])                      # (tm, out_rows_pad)
    sig = pl.reciprocal(1.0 + jnp.exp(-logits), approx=True)   # sigmoid on EUP
    m_ref[...] = sig.T                            # (out_rows_pad, tm) lane-dense


# ----------------------------------------------------------------------------
# Executor (synthetic parameters, deterministic init)
# ----------------------------------------------------------------------------
class ExecutorPallas:
    def __init__(self, frame_len=32, frame_hop=16, hidden=32, num_spk=2,
                 get_mask=True, block_rows=2048, key=jax.random.PRNGKey(0)):
        assert frame_len == 2 * frame_hop, "in-kernel framing assumes hop = L/2"
        self.frame_len = frame_len
        self.frame_hop = frame_hop
        self.num_freq = frame_len // 2 + 1
        self.hidden = hidden
        self.num_spk = num_spk
        self.get_mask = get_mask
        # Row tile must be a multiple of 128 (lane dim of the transposed output).
        self.block_rows = max(128, _round_up(block_rows, 128))

        L, F, H = frame_len, self.num_freq, hidden
        n = jnp.arange(L, dtype=jnp.float32)
        k = jnp.arange(F, dtype=jnp.float32)
        ang = 2.0 * jnp.pi * n[:, None] * k[None, :] / L       # (L, F)
        self.dft_re = jnp.cos(ang).astype(jnp.float32)
        self.dft_im = (-jnp.sin(ang)).astype(jnp.float32)
        self.window = (0.5 - 0.5 * jnp.cos(2.0 * jnp.pi * n / L)
                       ).astype(jnp.float32).reshape(1, L)      # Hann, (1, L)

        # Window folded into the DFT; re/im halves padded to 128 lanes each so
        # the in-kernel split is vreg-aligned: dft_w_pad is (L, 256).
        dre = self.window.T * self.dft_re                       # (L, F)
        dim = self.window.T * self.dft_im                       # (L, F)
        self.dft_w_pad = (jnp.zeros((L, 256), jnp.float32)
                          .at[:, :F].set(dre)
                          .at[:, 128:128 + F].set(dim))

        k1, k2, k3, k4 = jax.random.split(key, 4)
        self.w1 = jax.random.normal(k1, (F, H), jnp.float32) * 0.1
        self.b1 = jax.random.normal(k2, (1, H), jnp.float32) * 0.01
        self.w2 = jax.random.normal(k3, (H, num_spk * F), jnp.float32) * 0.1
        self.b2 = jax.random.normal(k4, (1, num_spk * F), jnp.float32) * 0.01

        # w1 row-padded to K=128 (zero rows -> padded log-mag lanes contribute 0).
        self.w1_pad = jnp.zeros((128, H), jnp.float32).at[:F].set(self.w1)

        # Output head padded to a sublane multiple (34 -> 40) for the
        # transposed store; padding rows are sliced off under jit.
        self.out_rows = num_spk * F
        self.out_rows_pad = _round_up(self.out_rows, 8)
        pad = self.out_rows_pad - self.out_rows
        self.w2_pad = jnp.pad(self.w2, ((0, 0), (0, pad)))
        self.b2_pad = jnp.pad(self.b2, ((0, 0), (0, pad)))

        # Whole pipeline under jit: the hop-shifted slices feeding the kernel
        # and the post-kernel slice/reshape/transpose fuse around the call.
        self._jit_pipeline = jax.jit(self._pipeline)

    # ----- fused framing + STFT-features + mask network ---------------------
    def _pipeline(self, wav):
        N, S = wav.shape
        L, hop, F = self.frame_len, self.frame_hop, self.num_freq
        n_chunks = S // hop
        T = n_chunks - 1                         # == (S - L)//hop + 1 for S>=L
        M = N * T
        wav = wav.astype(jnp.float32)

        # hop-shifted halves of every frame (gather-free framing):
        #   frame (n,t) = [a[n*T+t] | b[n*T+t]]
        a = wav[:, :T * hop].reshape(M, hop)
        b = wav[:, hop:(T + 1) * hop].reshape(M, hop)

        # Row tile: as large as block_rows allows, but always >= 2 tiles so a
        # 2-TC chip (v7x megacore) keeps both cores busy.
        tm = min(self.block_rows, max(128, _round_up(pl.cdiv(M, 2), 128)))
        grid = pl.cdiv(M, tm)
        m_cols = grid * tm                       # kernel writes full blocks

        kernel = functools.partial(fused_exec_kernel, hop=hop)
        masks_t = pl.pallas_call(
            kernel,
            out_shape=jax.ShapeDtypeStruct((self.out_rows_pad, m_cols),
                                           jnp.float32),
            grid=(grid,),
            in_specs=[
                pl.BlockSpec((tm, hop), lambda i: (i, 0)),       # frame half a
                pl.BlockSpec((tm, hop), lambda i: (i, 0)),       # frame half b
                pl.BlockSpec((L, 256), lambda i: (0, 0)),        # resident weights
                pl.BlockSpec((128, self.hidden), lambda i: (0, 0)),
                pl.BlockSpec((1, self.hidden), lambda i: (0, 0)),
                pl.BlockSpec((self.hidden, self.out_rows_pad), lambda i: (0, 0)),
                pl.BlockSpec((1, self.out_rows_pad), lambda i: (0, 0)),
            ],
            out_specs=pl.BlockSpec((self.out_rows_pad, tm), lambda i: (0, i)),
            compiler_params=pltpu.CompilerParams(
                dimension_semantics=("parallel",),
                vmem_limit_bytes=32 * 1024 * 1024),
        )(a, b, self.dft_w_pad, self.w1_pad, self.b1, self.w2_pad, self.b2_pad)

        # (spk*F, N*T) -> (spk, N, F, T); N<->F swap is a cheap non-minor copy
        # fused under jit (T stays the minor axis as produced by the kernel).
        masks_t = masks_t[:self.out_rows, :M]
        masks = masks_t.reshape(self.num_spk, F, N, T).transpose(0, 2, 1, 3)
        return masks

    # ----- forward ----------------------------------------------------------
    def forward(self, egs):
        wav = egs["mix"]                                         # (N, S)
        masks = self._jit_pipeline(wav)                          # (spk, N, F, T)
        out = [masks[s] for s in range(self.num_spk)]            # list of N x F x T

        if self.get_mask:
            return out

        # get_mask=False fallback (not the default path): mag via plain JAX.
        N, S = wav.shape
        hop, L, F = self.frame_hop, self.frame_len, self.num_freq
        T = S // hop - 1
        a = wav[:, :T * hop].reshape(N * T, hop)
        b = wav[:, hop:(T + 1) * hop].reshape(N * T, hop)
        frames = jnp.concatenate([a, b], axis=-1).astype(jnp.float32) * self.window
        re = frames @ self.dft_re
        im = frames @ self.dft_im
        mag = jnp.sqrt(re * re + im * im).reshape(N, T, F).transpose(0, 2, 1)
        # TODO(synk): iSTFT (overlap-add resynthesis) omitted; returning
        # mask-applied magnitudes instead of waveforms.
        return [m * mag for m in out]


# ----------------------------------------------------------------------------
# Pure-JAX reference (for correctness check)
# ----------------------------------------------------------------------------
def reference_forward(ex, wav):
    N, S = wav.shape
    L, hop, F = ex.frame_len, ex.frame_hop, ex.num_freq
    T = S // hop - 1
    a = wav[:, :T * hop].reshape(N * T, hop)
    b = wav[:, hop:(T + 1) * hop].reshape(N * T, hop)
    frames = jnp.concatenate([a, b], axis=-1).astype(jnp.float32) * ex.window
    re = frames @ ex.dft_re
    im = frames @ ex.dft_im
    mag_flat = jnp.sqrt(re * re + im * im)
    f = jnp.log(mag_flat + 1e-6)
    h = jnp.maximum(f @ ex.w1 + ex.b1, 0.0)
    m_flat = jax.nn.sigmoid(h @ ex.w2 + ex.b2)
    masks = m_flat.reshape(N, T, ex.num_spk, F).transpose(2, 0, 3, 1)
    return [masks[s] for s in range(ex.num_spk)]


if __name__ == "__main__":
    key = jax.random.PRNGKey(0)
    k_wav, k_par = jax.random.split(key)

    # N=2 utterances, 2064 samples -> T=128 frames each -> M=256 rows.
    # With tm capped at ceil(M/2)=128 the grid has 2 steps, exercising the
    # pipeline and the 2-tile megacore split even at this small size.
    N, S = 2, 2064
    wav = jax.random.normal(k_wav, (N, S), jnp.float32)

    ex = ExecutorPallas(frame_len=32, frame_hop=16, hidden=32, num_spk=2,
                        get_mask=True, key=k_par)

    out = ex.forward({"mix": wav})
    out = [jax.block_until_ready(m) for m in out]

    ref = reference_forward(ex, wav)
    for m_p, m_r in zip(out, ref):
        assert m_p.shape == m_r.shape
        # Tolerance covers the approx-reciprocal sigmoid (EUP path) vs exact f32.
        err = float(jnp.max(jnp.abs(m_p - m_r)))
        assert jnp.allclose(m_p, m_r, atol=5e-3, rtol=5e-3), err

    print("KERNEL_OK")
</pallas_src>

<mosaic_0001>
module attributes {stable_mosaic.version = 11 : i64} {
  func.func @fused_exec_kernel(%arg0: i32, %arg1: memref<128x16xf32, #tpu.memory_space<vmem>>, %arg2: memref<128x16xf32, #tpu.memory_space<vmem>>, %arg3: memref<32x256xf32, #tpu.memory_space<vmem>>, %arg4: memref<128x32xf32, #tpu.memory_space<vmem>>, %arg5: memref<1x32xf32, #tpu.memory_space<vmem>>, %arg6: memref<32x40xf32, #tpu.memory_space<vmem>>, %arg7: memref<1x40xf32, #tpu.memory_space<vmem>>, %arg8: memref<40x128xf32, #tpu.memory_space<vmem>>) attributes {dimension_semantics = [#tpu.dimension_semantics<parallel>], iteration_bounds = array<i64: 2>, scalar_prefetch = 0 : i64, scratch_operands = 0 : i64, tpu.core_type = #tpu.core_type<tc>, window_params = [{transform_indices = @transform_0, window_bounds = array<i64: 128, 16>}, {transform_indices = @transform_1, window_bounds = array<i64: 128, 16>}, {pipeline_mode = #tpu.pipeline_mode<synchronous>, transform_indices = @transform_2, window_bounds = array<i64: 32, 256>}, {pipeline_mode = #tpu.pipeline_mode<synchronous>, transform_indices = @transform_3, window_bounds = array<i64: 128, 32>}, {pipeline_mode = #tpu.pipeline_mode<synchronous>, transform_indices = @transform_4, window_bounds = array<i64: 1, 32>}, {pipeline_mode = #tpu.pipeline_mode<synchronous>, transform_indices = @transform_5, window_bounds = array<i64: 32, 40>}, {pipeline_mode = #tpu.pipeline_mode<synchronous>, transform_indices = @transform_6, window_bounds = array<i64: 1, 40>}, {transform_indices = @transform_7, window_bounds = array<i64: 40, 128>}]} {
    %c0 = arith.constant 0 : index
    %c0_0 = arith.constant 0 : index
    %0 = vector.load %arg3[%c0, %c0_0] : memref<32x256xf32, #tpu.memory_space<vmem>>, vector<32x256xf32>
    %c0_1 = arith.constant 0 : index
    %c0_2 = arith.constant 0 : index
    %1 = vector.load %arg1[%c0_1, %c0_2] : memref<128x16xf32, #tpu.memory_space<vmem>>, vector<128x16xf32>
    %2 = vector.extract_strided_slice %0 {offsets = [0, 0], sizes = [16, 256], strides = [1, 1]} : vector<32x256xf32> to vector<16x256xf32>
    %cst = arith.constant dense<0.000000e+00> : vector<128x256xf32>
    %3 = tpu.matmul %1, %2, %cst {dimension_numbers = #tpu.dot_dimension_numbers<[1], [0], [0], [1], [0, 0, 1, 1], [], []>} : vector<128x16xf32>, vector<16x256xf32>, vector<128x256xf32> -> vector<128x256xf32>
    %c0_3 = arith.constant 0 : index
    %c0_4 = arith.constant 0 : index
    %4 = vector.load %arg2[%c0_3, %c0_4] : memref<128x16xf32, #tpu.memory_space<vmem>>, vector<128x16xf32>
    %5 = vector.extract_strided_slice %0 {offsets = [16, 0], sizes = [16, 256], strides = [1, 1]} : vector<32x256xf32> to vector<16x256xf32>
    %cst_5 = arith.constant dense<0.000000e+00> : vector<128x256xf32>
    %6 = tpu.matmul %4, %5, %cst_5 {dimension_numbers = #tpu.dot_dimension_numbers<[1], [0], [0], [1], [0, 0, 1, 1], [], []>} : vector<128x16xf32>, vector<16x256xf32>, vector<128x256xf32> -> vector<128x256xf32>
    %7 = arith.addf %3, %6 : vector<128x256xf32>
    %8 = vector.extract_strided_slice %7 {offsets = [0, 0], sizes = [128, 128], strides = [1, 1]} : vector<128x256xf32> to vector<128x128xf32>
    %9 = vector.extract_strided_slice %7 {offsets = [0, 128], sizes = [128, 128], strides = [1, 1]} : vector<128x256xf32> to vector<128x128xf32>
    %10 = arith.mulf %8, %8 : vector<128x128xf32>
    %11 = arith.mulf %9, %9 : vector<128x128xf32>
    %12 = arith.addf %10, %11 : vector<128x128xf32>
    %13 = math.sqrt %12 : vector<128x128xf32>
    %cst_6 = arith.constant 9.99999997E-7 : f32
    %14 = vector.broadcast %cst_6 : f32 to vector<128x128xf32>
    %15 = arith.addf %13, %14 : vector<128x128xf32>
    %16 = math.log %15 : vector<128x128xf32>
    %c0_7 = arith.constant 0 : index
    %c0_8 = arith.constant 0 : index
    %17 = vector.load %arg4[%c0_7, %c0_8] : memref<128x32xf32, #tpu.memory_space<vmem>>, vector<128x32xf32>
    %cst_9 = arith.constant dense<0.000000e+00> : vector<128x32xf32>
    %18 = tpu.matmul %16, %17, %cst_9 {dimension_numbers = #tpu.dot_dimension_numbers<[1], [0], [0], [1], [0, 0, 1, 1], [], []>} : vector<128x128xf32>, vector<128x32xf32>, vector<128x32xf32> -> vector<128x32xf32>
    %c0_10 = arith.constant 0 : index
    %c0_11 = arith.constant 0 : index
    %19 = vector.load %arg5[%c0_10, %c0_11] : memref<1x32xf32, #tpu.memory_space<vmem>>, vector<1x32xf32>
    %20 = vector.broadcast %19 : vector<1x32xf32> to vector<128x32xf32>
    %21 = arith.addf %18, %20 : vector<128x32xf32>
    %cst_12 = arith.constant 0.000000e+00 : f32
    %22 = vector.broadcast %cst_12 : f32 to vector<128x32xf32>
    %23 = arith.maximumf %21, %22 : vector<128x32xf32>
    %c0_13 = arith.constant 0 : index
    %c0_14 = arith.constant 0 : index
    %24 = vector.load %arg6[%c0_13, %c0_14] : memref<32x40xf32, #tpu.memory_space<vmem>>, vector<32x40xf32>
    %cst_15 = arith.constant dense<0.000000e+00> : vector<128x40xf32>
    %25 = tpu.matmul %23, %24, %cst_15 {dimension_numbers = #tpu.dot_dimension_numbers<[1], [0], [0], [1], [0, 0, 1, 1], [], []>} : vector<128x32xf32>, vector<32x40xf32>, vector<128x40xf32> -> vector<128x40xf32>
    %c0_16 = arith.constant 0 : index
    %c0_17 = arith.constant 0 : index
    %26 = vector.load %arg7[%c0_16, %c0_17] : memref<1x40xf32, #tpu.memory_space<vmem>>, vector<1x40xf32>
    %27 = vector.broadcast %26 : vector<1x40xf32> to vector<128x40xf32>
    %28 = arith.addf %25, %27 : vector<128x40xf32>
    %cst_18 = arith.constant 0.000000e+00 : f32
    %29 = vector.broadcast %cst_18 : f32 to vector<128x40xf32>
    %30 = arith.subf %29, %28 : vector<128x40xf32>
    %31 = math.exp %30 : vector<128x40xf32>
    %cst_19 = arith.constant 1.000000e+00 : f32
    %32 = vector.broadcast %cst_19 : f32 to vector<128x40xf32>
    %33 = arith.addf %32, %31 : vector<128x40xf32>
    %34 = tpu.reciprocal %33 {approx = true} : vector<128x40xf32> -> vector<128x40xf32>
    %35 = tpu.transpose %34, [1, 0] : vector<128x40xf32> -> vector<40x128xf32>
    %c0_20 = arith.constant 0 : index
    %c0_21 = arith.constant 0 : index
    %36 = vector.load %arg8[%c0_20, %c0_21] : memref<40x128xf32, #tpu.memory_space<vmem>>, vector<40x128xf32>
    tpu.vector_store %arg8[%c0_20, %c0_21], %35 {strides = array<i32>} : memref<40x128xf32, #tpu.memory_space<vmem>>, vector<40x128xf32>,
    return
  }
  func.func @transform_0(%arg0: i32) -> (i32, i32) {
    %c0_i32 = arith.constant 0 : i32
    %c0_i32_0 = arith.constant 0 : i32
    return %arg0, %c0_i32 : i32, i32
  }
  func.func @transform_1(%arg0: i32) -> (i32, i32) {
    %c0_i32 = arith.constant 0 : i32
    %c0_i32_0 = arith.constant 0 : i32
    return %arg0, %c0_i32 : i32, i32
  }
  func.func @transform_2(%arg0: i32) -> (i32, i32) {
    %c0_i32 = arith.constant 0 : i32
    %c0_i32_0 = arith.constant 0 : i32
    %c0_i32_1 = arith.constant 0 : i32
    return %c0_i32, %c0_i32_0 : i32, i32
  }
  func.func @transform_3(%arg0: i32) -> (i32, i32) {
    %c0_i32 = arith.constant 0 : i32
    %c0_i32_0 = arith.constant 0 : i32
    %c0_i32_1 = arith.constant 0 : i32
    return %c0_i32, %c0_i32_0 : i32, i32
  }
  func.func @transform_4(%arg0: i32) -> (i32, i32) {
    %c0_i32 = arith.constant 0 : i32
    %c0_i32_0 = arith.constant 0 : i32
    %c0_i32_1 = arith.constant 0 : i32
    return %c0_i32, %c0_i32_0 : i32, i32
  }
  func.func @transform_5(%arg0: i32) -> (i32, i32) {
    %c0_i32 = arith.constant 0 : i32
    %c0_i32_0 = arith.constant 0 : i32
    %c0_i32_1 = arith.constant 0 : i32
    return %c0_i32, %c0_i32_0 : i32, i32
  }
  func.func @transform_6(%arg0: i32) -> (i32, i32) {
    %c0_i32 = arith.constant 0 : i32
    %c0_i32_0 = arith.constant 0 : i32
    %c0_i32_1 = arith.constant 0 : i32
    return %c0_i32, %c0_i32_0 : i32, i32
  }
  func.func @transform_7(%arg0: i32) -> (i32, i32) {
    %c0_i32 = arith.constant 0 : i32
    %c0_i32_0 = arith.constant 0 : i32
    return %c0_i32, %arg0 : i32, i32
  }
}

</mosaic_0001>

<llo_original>
// kernel: _pipeline.1
$region0: #{_pipeline.1}
  #allocation0 [shape = 'u32[]', space=smem, size = 0x4, offset = 0x4, fixed_abs, tag = 'smem constant byte address 0x4 - core index']
  #allocation1 [shape = 'u32[72,128]{1,0:T(1,128)}', space=vmem, size = 0x9000, scoped, tag = 'internal scratch']
  %s0 = inlined_call_operand.vmem [shape: f32[256,16], index: 0, kind: input, shape index: {}]
  %s1 = inlined_call_operand.vmem [shape: f32[256,16], index: 1, kind: input, shape index: {}]
  %s2 = inlined_call_operand.vmem [shape: f32[32,256], index: 2, kind: input, shape index: {}]
  %s3 = inlined_call_operand.vmem [shape: f32[128,32], index: 3, kind: input, shape index: {}]
  %s4 = inlined_call_operand.vmem [shape: f32[1,32], index: 4, kind: input, shape index: {}]
  %s5 = inlined_call_operand.vmem [shape: f32[32,40], index: 5, kind: input, shape index: {}]
  %s6 = inlined_call_operand.vmem [shape: f32[1,40], index: 6, kind: input, shape index: {}]
  %s7 = inlined_call_operand.vmem [shape: f32[40,256], index: 7, kind: output, shape index: {}]
  %s8 = sld [smem:[#allocation0]]
  $region95: #{_pipeline.1} parent=0
    _
  %s10 = ssub.s32 1, %s8
  %s11 = scalar_select 0, %s10, %s8
  $region1: #{_pipeline.1} parent=0
    #allocation2 [shape = 'u8[40960]{0}', space=vmem, size = 0xa000, scoped, tag = 'output window, operand 0']
    loop: start=0, step=1, limit=4
    $region2: #{_pipeline.1} parent=1 // loop_pre_header
      _
    $region3: #{_pipeline.1} parent=1 // loop_header
      %s13 = sphi 0, %s17
      %p14 = scmp.ge.s32.totalorder %s13, 4
      %s23 = sphi 0, %s25
      %s26 = sphi 0, %s23
      %s27 = sphi 0, %s26
      %s43 = sphi 0, %s27
      %s49 = sphi 0, %s51
      %s52 = sphi 0, %s49
      %s53 = sphi 0, %s52
      %s69 = sphi 0, %s53
      %s73 = sphi 0, %s73
      %s75 = sphi 0, %s73
      %s76 = sphi 0, %s75
      %s90 = sphi 0, %s76
      %s94 = sphi 0, %s94
      %s96 = sphi 0, %s94
      %s97 = sphi 0, %s96
      %s111 = sphi 0, %s97
      %s115 = sphi 0, %s115
      %s117 = sphi 0, %s115
      %s118 = sphi 0, %s117
      %s132 = sphi 0, %s118
      %s136 = sphi 0, %s136
      %s138 = sphi 0, %s136
      %s139 = sphi 0, %s138
      %s153 = sphi 0, %s139
      %s157 = sphi 0, %s157
      %s159 = sphi 0, %s157
      %s160 = sphi 0, %s159
      %s174 = sphi 0, %s160
      %s180 = sphi 0, %s182
      %s183 = sphi 0, %s180
      %s184 = sphi 0, %s183
      %s200 = sphi 0, %s184
    $region4: #{_pipeline.1} parent=1 // loop_header_branch
      %16 = sbr.rel (%p14) target = $region8
    $region5: #{_pipeline.1} parent=1 // loop_body
      %s18 = ssub.s32 %s13, 1
      %s19 = ssub.s32 %s13, 2
      %s20 = sadd.s32 %s13, 1
      %s21 = ssub.s32 %s13, %s20
      %p22 = scmp.eq.s32.totalorder %s21, 0
      %s24 = sadd.s32 %s23, 1
      %s25 = scalar_select %p22, %s23, %s24
      %p28 = pneg %p22
      %p29 = scmp.eq.s32.totalorder %s13, 1
      %p30 = por %p28, %p29
      %p31 = scmp.ne.s32.totalorder %s23, %s26
      %p32 = scmp.eq.s32.totalorder %s13, 0
      %p33 = por %p31, %p32
      %p34 = scmp.ne.s32.totalorder %s23, %s26
      %p35 = scmp.eq.s32.totalorder %s18, 1
      %p36 = por %p34, %p35
      %p37 = scmp.ne.s32.totalorder %s26, %s27
      %p38 = scmp.eq.s32.totalorder %s18, 0
      %p39 = por %p37, %p38
      %p40 = scmp.ne.s32.totalorder %s26, %s27
      %p41 = scmp.eq.s32.totalorder %s19, 1
      %p42 = por %p40, %p41
      %p44 = scmp.ne.s32.totalorder %s27, %s43
      %p45 = scmp.eq.s32.totalorder %s19, 0
      %p46 = por %p44, %p45
      %s47 = ssub.s32 %s13, %s20
      %p48 = scmp.eq.s32.totalorder %s47, 0
      %s50 = sadd.s32 %s49, 1
      %s51 = scalar_select %p48, %s49, %s50
      %p54 = pneg %p48
      %p55 = scmp.eq.s32.totalorder %s13, 1
      %p56 = por %p54, %p55
      %p57 = scmp.ne.s32.totalorder %s49, %s52
      %p58 = scmp.eq.s32.totalorder %s13, 0
      %p59 = por %p57, %p58
      %p60 = scmp.ne.s32.totalorder %s49, %s52
      %p61 = scmp.eq.s32.totalorder %s18, 1
      %p62 = por %p60, %p61
      %p63 = scmp.ne.s32.totalorder %s52, %s53
      %p64 = scmp.eq.s32.totalorder %s18, 0
      %p65 = por %p63, %p64
      %p66 = scmp.ne.s32.totalorder %s52, %s53
      %p67 = scmp.eq.s32.totalorder %s19, 1
      %p68 = por %p66, %p67
      %p70 = scmp.ne.s32.totalorder %s53, %s69
      %p71 = scmp.eq.s32.totalorder %s19, 0
      %p72 = por %p70, %p71
      %s74 = sadd.s32 %s73, 1
      %p77 = scmp.eq.s32.totalorder %s13, 1
      %p78 = scmp.ne.s32.totalorder %s73, %s75
      %p79 = scmp.eq.s32.totalorder %s13, 0
      %p80 = por %p78, %p79
      %p81 = scmp.ne.s32.totalorder %s73, %s75
      %p82 = scmp.eq.s32.totalorder %s18, 1
      %p83 = por %p81, %p82
      %p84 = scmp.ne.s32.totalorder %s75, %s76
      %p85 = scmp.eq.s32.totalorder %s18, 0
      %p86 = por %p84, %p85
      %p87 = scmp.ne.s32.totalorder %s75, %s76
      %p88 = scmp.eq.s32.totalorder %s19, 1
      %p89 = por %p87, %p88
      %p91 = scmp.ne.s32.totalorder %s76, %s90
      %p92 = scmp.eq.s32.totalorder %s19, 0
      %p93 = por %p91, %p92
      %s95 = sadd.s32 %s94, 1
      %p98 = scmp.eq.s32.totalorder %s13, 1
      %p99 = scmp.ne.s32.totalorder %s94, %s96
      %p100 = scmp.eq.s32.totalorder %s13, 0
      %p101 = por %p99, %p100
      %p102 = scmp.ne.s32.totalorder %s94, %s96
      %p103 = scmp.eq.s32.totalorder %s18, 1
      %p104 = por %p102, %p103
      %p105 = scmp.ne.s32.totalorder %s96, %s97
      %p106 = scmp.eq.s32.totalorder %s18, 0
      %p107 = por %p105, %p106
      %p108 = scmp.ne.s32.totalorder %s96, %s97
      %p109 = scmp.eq.s32.totalorder %s19, 1
      %p110 = por %p108, %p109
      %p112 = scmp.ne.s32.totalorder %s97, %s111
      %p113 = scmp.eq.s32.totalorder %s19, 0
      %p114 = por %p112, %p113
      %s116 = sadd.s32 %s115, 1
      %p119 = scmp.eq.s32.totalorder %s13, 1
      %p120 = scmp.ne.s32.totalorder %s115, %s117
      %p121 = scmp.eq.s32.totalorder %s13, 0
      %p122 = por %p120, %p121
      %p123 = scmp.ne.s32.totalorder %s115, %s117
      %p124 = scmp.eq.s32.totalorder %s18, 1
      %p125 = por %p123, %p124
      %p126 = scmp.ne.s32.totalorder %s117, %s118
      %p127 = scmp.eq.s32.totalorder %s18, 0
      %p128 = por %p126, %p127
      %p129 = scmp.ne.s32.totalorder %s117, %s118
      %p130 = scmp.eq.s32.totalorder %s19, 1
      %p131 = por %p129, %p130
      %p133 = scmp.ne.s32.totalorder %s118, %s132
      %p134 = scmp.eq.s32.totalorder %s19, 0
      %p135 = por %p133, %p134
      %s137 = sadd.s32 %s136, 1
      %p140 = scmp.eq.s32.totalorder %s13, 1
      %p141 = scmp.ne.s32.totalorder %s136, %s138
      %p142 = scmp.eq.s32.totalorder %s13, 0
      %p143 = por %p141, %p142
      %p144 = scmp.ne.s32.totalorder %s136, %s138
      %p145 = scmp.eq.s32.totalorder %s18, 1
      %p146 = por %p144, %p145
      %p147 = scmp.ne.s32.totalorder %s138, %s139
      %p148 = scmp.eq.s32.totalorder %s18, 0
      %p149 = por %p147, %p148
      %p150 = scmp.ne.s32.totalorder %s138, %s139
      %p151 = scmp.eq.s32.totalorder %s19, 1
      %p152 = por %p150, %p151
      %p154 = scmp.ne.s32.totalorder %s139, %s153
      %p155 = scmp.eq.s32.totalorder %s19, 0
      %p156 = por %p154, %p155
      %s158 = sadd.s32 %s157, 1
      %p161 = scmp.eq.s32.totalorder %s13, 1
      %p162 = scmp.ne.s32.totalorder %s157, %s159
      %p163 = scmp.eq.s32.totalorder %s13, 0
      %p164 = por %p162, %p163
      %p165 = scmp.ne.s32.totalorder %s157, %s159
      %p166 = scmp.eq.s32.totalorder %s18, 1
      %p167 = por %p165, %p166
      %p168 = scmp.ne.s32.totalorder %s159, %s160
      %p169 = scmp.eq.s32.totalorder %s18, 0
      %p170 = por %p168, %p169
      %p171 = scmp.ne.s32.totalorder %s159, %s160
      %p172 = scmp.eq.s32.totalorder %s19, 1
      %p173 = por %p171, %p172
      %p175 = scmp.ne.s32.totalorder %s160, %s174
      %p176 = scmp.eq.s32.totalorder %s19, 0
      %p177 = por %p175, %p176
      %s178 = ssub.s32 %s13, %s20
      %p179 = scmp.eq.s32.totalorder %s178, 0
      %s181 = sadd.s32 %s180, 1
      %s182 = scalar_select %p179, %s180, %s181
      %p185 = pneg %p179
      %p186 = scmp.eq.s32.totalorder %s13, 1
      %p187 = por %p185, %p186
      %p188 = scmp.ne.s32.totalorder %s180, %s183
      %p189 = scmp.eq.s32.totalorder %s13, 0
      %p190 = por %p188, %p189
      %p191 = scmp.ne.s32.totalorder %s180, %s183
      %p192 = scmp.eq.s32.totalorder %s18, 1
      %p193 = por %p191, %p192
      %p194 = scmp.ne.s32.totalorder %s183, %s184
      %p195 = scmp.eq.s32.totalorder %s18, 0
      %p196 = por %p194, %p195
      %p197 = scmp.ne.s32.totalorder %s183, %s184
      %p198 = scmp.eq.s32.totalorder %s19, 1
      %p199 = por %p197, %p198
      %p201 = scmp.ne.s32.totalorder %s184, %s200
      %p202 = scmp.eq.s32.totalorder %s19, 0
      %p203 = por %p201, %p202
      %p204 = scmp.le.s32.totalorder 1, %s13
      %p205 = scmp.lt.s32.totalorder %s13, 3
      %p206 = pnand %p204, %p205
      %p207 = pneg %p206
      // Predicated region
      $region9: #{_pipeline.1} parent=5 // pred_check
        _
      $region10: #{_pipeline.1} parent=5 // pred_check_branch
        %209 = sbr.rel (%p206) target = $region12
      $region11: #{_pipeline.1} parent=5 // pred_region
        %s210 = ssub.s32 %s13, 1
        // Predicated region
        $region13: #{_pipeline.1} parent=11 // pred_check
          %p211 = pneg %p86
        $region14: #{_pipeline.1} parent=11 // pred_check_branch
          %213 = sbr.rel (%p211) target = $region16
        $region15: #{_pipeline.1} parent=11 // pred_region
          _
        $region16: #{_pipeline.1} parent=11 // pred_fallthru
          _
        // Predicated region
        $region17: #{_pipeline.1} parent=11 // pred_check
          %p214 = pneg %p107
        $region18: #{_pipeline.1} parent=11 // pred_check_branch
          %216 = sbr.rel (%p214) target = $region20
        $region19: #{_pipeline.1} parent=11 // pred_region
          _
        $region20: #{_pipeline.1} parent=11 // pred_fallthru
          _
        // Predicated region
        $region21: #{_pipeline.1} parent=11 // pred_check
          %p217 = pneg %p128
        $region22: #{_pipeline.1} parent=11 // pred_check_branch
          %219 = sbr.rel (%p217) target = $region24
        $region23: #{_pipeline.1} parent=11 // pred_region
          _
        $region24: #{_pipeline.1} parent=11 // pred_fallthru
          _
        // Predicated region
        $region25: #{_pipeline.1} parent=11 // pred_check
          %p220 = pneg %p149
        $region26: #{_pipeline.1} parent=11 // pred_check_branch
          %222 = sbr.rel (%p220) target = $region28
        $region27: #{_pipeline.1} parent=11 // pred_region
          _
        $region28: #{_pipeline.1} parent=11 // pred_fallthru
          _
        // Predicated region
        $region29: #{_pipeline.1} parent=11 // pred_check
          %p223 = pneg %p170
        $region30: #{_pipeline.1} parent=11 // pred_check_branch
          %225 = sbr.rel (%p223) target = $region32
        $region31: #{_pipeline.1} parent=11 // pred_region
          _
        $region32: #{_pipeline.1} parent=11 // pred_fallthru
          _
      $region12: #{_pipeline.1} parent=5 // pred_fallthru
        _
      %p226 = scmp.lt.s32.totalorder %s13, 2
      // Predicated region
      $region33: #{_pipeline.1} parent=5 // pred_check
        %p227 = pneg %p226
      $region34: #{_pipeline.1} parent=5 // pred_check_branch
        %229 = sbr.rel (%p227) target = $region36
      $region35: #{_pipeline.1} parent=5 // pred_region
        // Predicated region
        $region37: #{_pipeline.1} parent=35 // pred_check
          %p230 = pneg %p33
        $region38: #{_pipeline.1} parent=35 // pred_check_branch
          %232 = sbr.rel (%p230) target = $region40
        $region39: #{_pipeline.1} parent=35 // pred_region
          %s233 = smul.u32 16, %s13
          %p234 = scmp.lt.s32.totalorder %s233, 31
          %s235 = scalar_select %p234, %s233, 31
          %s236 = smul.addr %s235, 8
          %s237 = scalar_lea.vmem %s0, %s236
          %s238 = smul.u32 16, %s13
        $region40: #{_pipeline.1} parent=35 // pred_fallthru
          _
        // Predicated region
        $region41: #{_pipeline.1} parent=35 // pred_check
          %p239 = pneg %p59
        $region42: #{_pipeline.1} parent=35 // pred_check_branch
          %241 = sbr.rel (%p239) target = $region44
        $region43: #{_pipeline.1} parent=35 // pred_region
          %s242 = smul.u32 16, %s13
          %p243 = scmp.lt.s32.totalorder %s242, 31
          %s244 = scalar_select %p243, %s242, 31
          %s245 = smul.addr %s244, 8
          %s246 = scalar_lea.vmem %s1, %s245
          %s247 = smul.u32 16, %s13
        $region44: #{_pipeline.1} parent=35 // pred_fallthru
          _
      $region36: #{_pipeline.1} parent=5 // pred_fallthru
        _
      %p248 = scmp.le.s32.totalorder 1, %s13
      %p249 = scmp.lt.s32.totalorder %s13, 3
      %p250 = pnand %p248, %p249
      %p251 = pneg %p250
      // Predicated region
      $region45: #{_pipeline.1} parent=5 // pred_check
        _
      $region46: #{_pipeline.1} parent=5 // pred_check_branch
        %253 = sbr.rel (%p250) target = $region48
      $region47: #{_pipeline.1} parent=5 // pred_region
        %s254 = ssub.s32 %s13, 1
        %s255 = smul.u32 16, %s18
        %p256 = scmp.lt.s32.totalorder %s255, 31
        %s257 = scalar_select %p256, %s255, 31
        %s258 = smul.addr %s257, 8
        %s259 = scalar_lea.vmem %s0, %s258
        %p260 = pneg %p39
        %p261 = pneg %p36
        %s262 = smul.u32 16, %s18
        %p263 = scmp.lt.s32.totalorder %s262, 31
        %s264 = scalar_select %p263, %s262, 31
        %s265 = smul.addr %s264, 8
        %s266 = scalar_lea.vmem %s1, %s265
        %p267 = pneg %p65
        %p268 = pneg %p62
        %p269 = pneg %p86
        %p270 = pneg %p83
        %p271 = pneg %p107
        %p272 = pneg %p104
        %p273 = pneg %p128
        %p274 = pneg %p125
        %p275 = pneg %p149
        %p276 = pneg %p146
        %p277 = pneg %p170
        %p278 = pneg %p167
        %p279 = pneg %p196
        %p280 = pneg %p193
        %s281 = sand.u32 %s183, 1
        %s282 = sand.u32 %s183, 1
        %s283 = smul.addr %s282, 40
        %s284 = scalar_lea.vmem [#allocation2], %s283
        %s285 = smul.u32 16, %s18
        %p286 = scmp.lt.s32.totalorder %s285, 31
        %s287 = scalar_select %p286, %s285, 31
        %s288 = smul.addr %s287, 8
        %s289 = scalar_lea.vmem %s0, %s288
        %s290 = smul.u32 16, %s18
        %s291 = smul.u32 16, %s18
        %p292 = scmp.lt.s32.totalorder %s291, 31
        %s293 = scalar_select %p292, %s291, 31
        %s294 = smul.addr %s293, 8
        %s295 = scalar_lea.vmem %s1, %s294
        %s296 = smul.u32 16, %s18
        %v297 = vld [vmem:[%s2] sm:$0xff]
        %v298 = vld [vmem:[%s2 + $0x8] sm:$0xff]
        %v299 = vld [vmem:[%s2 + $0x10] sm:$0xff]
        %v300 = vld [vmem:[%s2 + $0x18] sm:$0xff]
        %v301 = vld [vmem:[%s2 + $0x20] sm:$0xff]
        %v302 = vld [vmem:[%s2 + $0x28] sm:$0xff]
        %v303 = vld [vmem:[%s2 + $0x30] sm:$0xff]
        %v304 = vld [vmem:[%s2 + $0x38] sm:$0xff]
        %v305 = vld [vmem:[%s289] sm:$0xff]
        %v306 = vld [vmem:[%s289 + $0x8] sm:$0xff]
        %v307 = vld [vmem:[%s289 + $0x10] sm:$0xff]
        %v308 = vld [vmem:[%s289 + $0x18] sm:$0xff]
        %v309 = vld [vmem:[%s289 + $0x20] sm:$0xff]
        %v310 = vld [vmem:[%s289 + $0x28] sm:$0xff]
        %v311 = vld [vmem:[%s289 + $0x30] sm:$0xff]
        %v312 = vld [vmem:[%s289 + $0x38] sm:$0xff]
        %v313 = vld [vmem:[%s289 + $0x40] sm:$0xff]
        %v314 = vld [vmem:[%s289 + $0x48] sm:$0xff]
        %v315 = vld [vmem:[%s289 + $0x50] sm:$0xff]
        %v316 = vld [vmem:[%s289 + $0x58] sm:$0xff]
        %v317 = vld [vmem:[%s289 + $0x60] sm:$0xff]
        %v318 = vld [vmem:[%s289 + $0x68] sm:$0xff]
        %v319 = vld [vmem:[%s289 + $0x70] sm:$0xff]
        %v320 = vld [vmem:[%s289 + $0x78] sm:$0xff]
        %v321 = vld [vmem:[%s295] sm:$0xff]
        %v322 = vld [vmem:[%s295 + $0x8] sm:$0xff]
        %v323 = vld [vmem:[%s295 + $0x10] sm:$0xff]
        %v324 = vld [vmem:[%s295 + $0x18] sm:$0xff]
        %v325 = vld [vmem:[%s295 + $0x20] sm:$0xff]
        %v326 = vld [vmem:[%s295 + $0x28] sm:$0xff]
        %v327 = vld [vmem:[%s295 + $0x30] sm:$0xff]
        %v328 = vld [vmem:[%s295 + $0x38] sm:$0xff]
        %v329 = vld [vmem:[%s295 + $0x40] sm:$0xff]
        %v330 = vld [vmem:[%s295 + $0x48] sm:$0xff]
        %v331 = vld [vmem:[%s295 + $0x50] sm:$0xff]
        %v332 = vld [vmem:[%s295 + $0x58] sm:$0xff]
        %v333 = vld [vmem:[%s295 + $0x60] sm:$0xff]
        %v334 = vld [vmem:[%s295 + $0x68] sm:$0xff]
        %v335 = vld [vmem:[%s295 + $0x70] sm:$0xff]
        %v336 = vld [vmem:[%s295 + $0x78] sm:$0xff]
        %vm337 = vcmask 130048
        %v339 = vsel %vm337, %v321, 0
        %v342 = vsel %vm337, %v322, 0
        %v345 = vsel %vm337, %v323, 0
        %v348 = vsel %vm337, %v324, 0
        %v351 = vsel %vm337, %v325, 0
        %v354 = vsel %vm337, %v326, 0
        %v357 = vsel %vm337, %v327, 0
        %v360 = vsel %vm337, %v328, 0
        %v363 = vsel %vm337, %v329, 0
        %v366 = vsel %vm337, %v330, 0
        %v369 = vsel %vm337, %v331, 0
        %v372 = vsel %vm337, %v332, 0
        %v375 = vsel %vm337, %v333, 0
        %v378 = vsel %vm337, %v334, 0
        %v381 = vsel %vm337, %v335, 0
        %v384 = vsel %vm337, %v336, 0
        %386 = vmatpush.msra.mxu0 0.0
        %387 = vmatpush.msra.mxu0 0.0
        %388 = vmatpush.msra.mxu0 0.0
        %389 = vmatpush.msra.mxu0 0.0
        %390 = vmatpush.msra.mxu0 0.0
        %391 = vmatpush.msra.mxu0 0.0
        %392 = vmatpush.msra.mxu0 0.0
        %393 = vmatpush.msra.mxu0 0.0
        %394 = vmatpush.msra.mxu0 0.0
        %395 = vmatpush.msra.mxu0 0.0
        %396 = vmatpush.msra.mxu0 0.0
        %397 = vmatpush.msra.mxu0 0.0
        %398 = vmatpush.msra.mxu0 0.0
        %399 = vmatpush.msra.mxu0 0.0
        %400 = vmatpush.msra.mxu0 %v303
        %401 = vmatpush.msra.mxu0 %v301
        %402 = vmatmul.f32.gmra.mxu0 %v339
        %v403 = vpop.f32.mrf.mxu0
        %v404 = vadd.f32 0.0, %v403
        %405 = vmatmul.f32.gmra.mxu0 %v342
        %v406 = vpop.f32.mrf.mxu0
        %v407 = vadd.f32 0.0, %v406
        %408 = vmatmul.f32.gmra.mxu0 %v345
        %v409 = vpop.f32.mrf.mxu0
        %v410 = vadd.f32 0.0, %v409
        %411 = vmatmul.f32.gmra.mxu0 %v348
        %v412 = vpop.f32.mrf.mxu0
        %v413 = vadd.f32 0.0, %v412
        %414 = vmatmul.f32.gmra.mxu0 %v351
        %v415 = vpop.f32.mrf.mxu0
        %v416 = vadd.f32 0.0, %v415
        %417 = vmatmul.f32.gmra.mxu0 %v354
        %v418 = vpop.f32.mrf.mxu0
        %v419 = vadd.f32 0.0, %v418
        %420 = vmatmul.f32.gmra.mxu0 %v357
        %v421 = vpop.f32.mrf.mxu0
        %v422 = vadd.f32 0.0, %v421
        %423 = vmatmul.f32.gmra.mxu0 %v360
        %v424 = vpop.f32.mrf.mxu0
        %v425 = vadd.f32 0.0, %v424
        %426 = vmatmul.f32.gmra.mxu0 %v363
        %v427 = vpop.f32.mrf.mxu0
        %v428 = vadd.f32 0.0, %v427
        %429 = vmatmul.f32.gmra.mxu0 %v366
        %v430 = vpop.f32.mrf.mxu0
        %v431 = vadd.f32 0.0, %v430
        %432 = vmatmul.f32.gmra.mxu0 %v369
        %v433 = vpop.f32.mrf.mxu0
        %v434 = vadd.f32 0.0, %v433
        %435 = vmatmul.f32.gmra.mxu0 %v372
        %v436 = vpop.f32.mrf.mxu0
        %v437 = vadd.f32 0.0, %v436
        %438 = vmatmul.f32.gmra.mxu0 %v375
        %v439 = vpop.f32.mrf.mxu0
        %v440 = vadd.f32 0.0, %v439
        %441 = vmatmul.f32.gmra.mxu0 %v378
        %v442 = vpop.f32.mrf.mxu0
        %v443 = vadd.f32 0.0, %v442
        %444 = vmatmul.f32.gmra.mxu0 %v381
        %v445 = vpop.f32.mrf.mxu0
        %v446 = vadd.f32 0.0, %v445
        %447 = vmatmul.f32.gmra.mxu0 %v384
        %v448 = vpop.f32.mrf.mxu0
        %v449 = vadd.f32 0.0, %v448
        %450 = vdwg.mxu0
        %451 = vmatpush.msra.mxu0 0.0
        %452 = vmatpush.msra.mxu0 0.0
        %453 = vmatpush.msra.mxu0 0.0
        %454 = vmatpush.msra.mxu0 0.0
        %455 = vmatpush.msra.mxu0 0.0
        %456 = vmatpush.msra.mxu0 0.0
        %457 = vmatpush.msra.mxu0 0.0
        %458 = vmatpush.msra.mxu0 0.0
        %459 = vmatpush.msra.mxu0 0.0
        %460 = vmatpush.msra.mxu0 0.0
        %461 = vmatpush.msra.mxu0 0.0
        %462 = vmatpush.msra.mxu0 0.0
        %463 = vmatpush.msra.mxu0 0.0
        %464 = vmatpush.msra.mxu0 0.0
        %465 = vmatpush.msra.mxu0 %v304
        %466 = vmatpush.msra.mxu0 %v302
        %467 = vmatmul.f32.gmra.mxu0 %v339
        %v468 = vpop.f32.mrf.mxu0
        %v469 = vadd.f32 0.0, %v468
        %470 = vmatmul.f32.gmra.mxu0 %v342
        %v471 = vpop.f32.mrf.mxu0
        %v472 = vadd.f32 0.0, %v471
        %473 = vmatmul.f32.gmra.mxu0 %v345
        %v474 = vpop.f32.mrf.mxu0
        %v475 = vadd.f32 0.0, %v474
        %476 = vmatmul.f32.gmra.mxu0 %v348
        %v477 = vpop.f32.mrf.mxu0
        %v478 = vadd.f32 0.0, %v477
        %479 = vmatmul.f32.gmra.mxu0 %v351
        %v480 = vpop.f32.mrf.mxu0
        %v481 = vadd.f32 0.0, %v480
        %482 = vmatmul.f32.gmra.mxu0 %v354
        %v483 = vpop.f32.mrf.mxu0
        %v484 = vadd.f32 0.0, %v483
        %485 = vmatmul.f32.gmra.mxu0 %v357
        %v486 = vpop.f32.mrf.mxu0
        %v487 = vadd.f32 0.0, %v486
        %488 = vmatmul.f32.gmra.mxu0 %v360
        %v489 = vpop.f32.mrf.mxu0
        %v490 = vadd.f32 0.0, %v489
        %491 = vmatmul.f32.gmra.mxu0 %v363
        %v492 = vpop.f32.mrf.mxu0
        %v493 = vadd.f32 0.0, %v492
        %494 = vmatmul.f32.gmra.mxu0 %v366
        %v495 = vpop.f32.mrf.mxu0
        %v496 = vadd.f32 0.0, %v495
        %497 = vmatmul.f32.gmra.mxu0 %v369
        %v498 = vpop.f32.mrf.mxu0
        %v499 = vadd.f32 0.0, %v498
        %500 = vmatmul.f32.gmra.mxu0 %v372
        %v501 = vpop.f32.mrf.mxu0
        %v502 = vadd.f32 0.0, %v501
        %503 = vmatmul.f32.gmra.mxu0 %v375
        %v504 = vpop.f32.mrf.mxu0
        %v505 = vadd.f32 0.0, %v504
        %506 = vmatmul.f32.gmra.mxu0 %v378
        %v507 = vpop.f32.mrf.mxu0
        %v508 = vadd.f32 0.0, %v507
        %509 = vmatmul.f32.gmra.mxu0 %v381
        %v510 = vpop.f32.mrf.mxu0
        %v511 = vadd.f32 0.0, %v510
        %512 = vmatmul.f32.gmra.mxu0 %v384
        %v513 = vpop.f32.mrf.mxu0
        %v514 = vadd.f32 0.0, %v513
        %515 = vdwg.mxu0
        %v517 = vsel %vm337, %v305, 0
        %v520 = vsel %vm337, %v306, 0
        %v523 = vsel %vm337, %v307, 0
        %v526 = vsel %vm337, %v308, 0
        %v529 = vsel %vm337, %v309, 0
        %v532 = vsel %vm337, %v310, 0
        %v535 = vsel %vm337, %v311, 0
        %v538 = vsel %vm337, %v312, 0
        %v541 = vsel %vm337, %v313, 0
        %v544 = vsel %vm337, %v314, 0
        %v547 = vsel %vm337, %v315, 0
        %v550 = vsel %vm337, %v316, 0
        %v553 = vsel %vm337, %v317, 0
        %v556 = vsel %vm337, %v318, 0
        %v559 = vsel %vm337, %v319, 0
        %v562 = vsel %vm337, %v320, 0
        %564 = vmatpush.msra.mxu0 0.0
        %565 = vmatpush.msra.mxu0 0.0
        %566 = vmatpush.msra.mxu0 0.0
        %567 = vmatpush.msra.mxu0 0.0
        %568 = vmatpush.msra.mxu0 0.0
        %569 = vmatpush.msra.mxu0 0.0
        %570 = vmatpush.msra.mxu0 0.0
        %571 = vmatpush.msra.mxu0 0.0
        %572 = vmatpush.msra.mxu0 0.0
        %573 = vmatpush.msra.mxu0 0.0
        %574 = vmatpush.msra.mxu0 0.0
        %575 = vmatpush.msra.mxu0 0.0
        %576 = vmatpush.msra.mxu0 0.0
        %577 = vmatpush.msra.mxu0 0.0
        %578 = vmatpush.msra.mxu0 %v299
        %579 = vmatpush.msra.mxu0 %v297
        %580 = vmatmul.f32.gmra.mxu0 %v517
        %v581 = vpop.f32.mrf.mxu0
        %v582 = vadd.f32 %v404, %v581
        %583 = vmatmul.f32.gmra.mxu0 %v520
        %v584 = vpop.f32.mrf.mxu0
        %v585 = vadd.f32 %v407, %v584
        %586 = vmatmul.f32.gmra.mxu0 %v523
        %v587 = vpop.f32.mrf.mxu0
        %v588 = vadd.f32 %v410, %v587
        %589 = vmatmul.f32.gmra.mxu0 %v526
        %v590 = vpop.f32.mrf.mxu0
        %v591 = vadd.f32 %v413, %v590
        %592 = vmatmul.f32.gmra.mxu0 %v529
        %v593 = vpop.f32.mrf.mxu0
        %v594 = vadd.f32 %v416, %v593
        %595 = vmatmul.f32.gmra.mxu0 %v532
        %v596 = vpop.f32.mrf.mxu0
        %v597 = vadd.f32 %v419, %v596
        %598 = vmatmul.f32.gmra.mxu0 %v535
        %v599 = vpop.f32.mrf.mxu0
        %v600 = vadd.f32 %v422, %v599
        %601 = vmatmul.f32.gmra.mxu0 %v538
        %v602 = vpop.f32.mrf.mxu0
        %v603 = vadd.f32 %v425, %v602
        %604 = vmatmul.f32.gmra.mxu0 %v541
        %v605 = vpop.f32.mrf.mxu0
        %v606 = vadd.f32 %v428, %v605
        %607 = vmatmul.f32.gmra.mxu0 %v544
        %v608 = vpop.f32.mrf.mxu0
        %v609 = vadd.f32 %v431, %v608
        %610 = vmatmul.f32.gmra.mxu0 %v547
        %v611 = vpop.f32.mrf.mxu0
        %v612 = vadd.f32 %v434, %v611
        %613 = vmatmul.f32.gmra.mxu0 %v550
        %v614 = vpop.f32.mrf.mxu0
        %v615 = vadd.f32 %v437, %v614
        %616 = vmatmul.f32.gmra.mxu0 %v553
        %v617 = vpop.f32.mrf.mxu0
        %v618 = vadd.f32 %v440, %v617
        %619 = vmatmul.f32.gmra.mxu0 %v556
        %v620 = vpop.f32.mrf.mxu0
        %v621 = vadd.f32 %v443, %v620
        %622 = vmatmul.f32.gmra.mxu0 %v559
        %v623 = vpop.f32.mrf.mxu0
        %v624 = vadd.f32 %v446, %v623
        %625 = vmatmul.f32.gmra.mxu0 %v562
        %v626 = vpop.f32.mrf.mxu0
        %v627 = vadd.f32 %v449, %v626
        %628 = vdwg.mxu0
        %629 = vmatpush.msra.mxu0 0.0
        %630 = vmatpush.msra.mxu0 0.0
        %631 = vmatpush.msra.mxu0 0.0
        %632 = vmatpush.msra.mxu0 0.0
        %633 = vmatpush.msra.mxu0 0.0
        %634 = vmatpush.msra.mxu0 0.0
        %635 = vmatpush.msra.mxu0 0.0
        %636 = vmatpush.msra.mxu0 0.0
        %637 = vmatpush.msra.mxu0 0.0
        %638 = vmatpush.msra.mxu0 0.0
        %639 = vmatpush.msra.mxu0 0.0
        %640 = vmatpush.msra.mxu0 0.0
        %641 = vmatpush.msra.mxu0 0.0
        %642 = vmatpush.msra.mxu0 0.0
        %643 = vmatpush.msra.mxu0 %v300
        %644 = vmatpush.msra.mxu0 %v298
        %645 = vmatmul.f32.gmra.mxu0 %v517
        %v646 = vpop.f32.mrf.mxu0
        %v647 = vadd.f32 %v469, %v646
        %648 = vmatmul.f32.gmra.mxu0 %v520
        %v649 = vpop.f32.mrf.mxu0
        %v650 = vadd.f32 %v472, %v649
        %651 = vmatmul.f32.gmra.mxu0 %v523
        %v652 = vpop.f32.mrf.mxu0
        %v653 = vadd.f32 %v475, %v652
        %654 = vmatmul.f32.gmra.mxu0 %v526
        %v655 = vpop.f32.mrf.mxu0
        %v656 = vadd.f32 %v478, %v655
        %657 = vmatmul.f32.gmra.mxu0 %v529
        %v658 = vpop.f32.mrf.mxu0
        %v659 = vadd.f32 %v481, %v658
        %660 = vmatmul.f32.gmra.mxu0 %v532
        %v661 = vpop.f32.mrf.mxu0
        %v662 = vadd.f32 %v484, %v661
        %663 = vmatmul.f32.gmra.mxu0 %v535
        %v664 = vpop.f32.mrf.mxu0
        %v665 = vadd.f32 %v487, %v664
        %666 = vmatmul.f32.gmra.mxu0 %v538
        %v667 = vpop.f32.mrf.mxu0
        %v668 = vadd.f32 %v490, %v667
        %669 = vmatmul.f32.gmra.mxu0 %v541
        %v670 = vpop.f32.mrf.mxu0
        %v671 = vadd.f32 %v493, %v670
        %672 = vmatmul.f32.gmra.mxu0 %v544
        %v673 = vpop.f32.mrf.mxu0
        %v674 = vadd.f32 %v496, %v673
        %675 = vmatmul.f32.gmra.mxu0 %v547
        %v676 = vpop.f32.mrf.mxu0
        %v677 = vadd.f32 %v499, %v676
        %678 = vmatmul.f32.gmra.mxu0 %v550
        %v679 = vpop.f32.mrf.mxu0
        %v680 = vadd.f32 %v502, %v679
        %681 = vmatmul.f32.gmra.mxu0 %v553
        %v682 = vpop.f32.mrf.mxu0
        %v683 = vadd.f32 %v505, %v682
        %684 = vmatmul.f32.gmra.mxu0 %v556
        %v685 = vpop.f32.mrf.mxu0
        %v686 = vadd.f32 %v508, %v685
        %687 = vmatmul.f32.gmra.mxu0 %v559
        %v688 = vpop.f32.mrf.mxu0
        %v689 = vadd.f32 %v511, %v688
        %690 = vmatmul.f32.gmra.mxu0 %v562
        %v691 = vpop.f32.mrf.mxu0
        %v692 = vadd.f32 %v514, %v691
        %693 = vdwg.mxu0
        %v694 = vmul.f32 %v582, %v582
        %v695 = vmul.f32 %v585, %v585
        %v696 = vmul.f32 %v588, %v588
        %v697 = vmul.f32 %v591, %v591
        %v698 = vmul.f32 %v594, %v594
        %v699 = vmul.f32 %v597, %v597
        %v700 = vmul.f32 %v600, %v600
        %v701 = vmul.f32 %v603, %v603
        %v702 = vmul.f32 %v606, %v606
        %v703 = vmul.f32 %v609, %v609
        %v704 = vmul.f32 %v612, %v612
        %v705 = vmul.f32 %v615, %v615
        %v706 = vmul.f32 %v618, %v618
        %v707 = vmul.f32 %v621, %v621
        %v708 = vmul.f32 %v624, %v624
        %v709 = vmul.f32 %v627, %v627
        %v710 = vmul.f32 %v647, %v647
        %v711 = vmul.f32 %v650, %v650
        %v712 = vmul.f32 %v653, %v653
        %v713 = vmul.f32 %v656, %v656
        %v714 = vmul.f32 %v659, %v659
        %v715 = vmul.f32 %v662, %v662
        %v716 = vmul.f32 %v665, %v665
        %v717 = vmul.f32 %v668, %v668
        %v718 = vmul.f32 %v671, %v671
        %v719 = vmul.f32 %v674, %v674
        %v720 = vmul.f32 %v677, %v677
        %v721 = vmul.f32 %v680, %v680
        %v722 = vmul.f32 %v683, %v683
        %v723 = vmul.f32 %v686, %v686
        %v724 = vmul.f32 %v689, %v689
        %v725 = vmul.f32 %v692, %v692
        %v726 = vadd.f32 %v694, %v710
        %v727 = vadd.f32 %v695, %v711
        %v728 = vadd.f32 %v696, %v712
        %v729 = vadd.f32 %v697, %v713
        %v730 = vadd.f32 %v698, %v714
        %v731 = vadd.f32 %v699, %v715
        %v732 = vadd.f32 %v700, %v716
        %v733 = vadd.f32 %v701, %v717
        %v734 = vadd.f32 %v702, %v718
        %v735 = vadd.f32 %v703, %v719
        %v736 = vadd.f32 %v704, %v720
        %v737 = vadd.f32 %v705, %v721
        %v738 = vadd.f32 %v706, %v722
        %v739 = vadd.f32 %v707, %v723
        %v740 = vadd.f32 %v708, %v724
        %v741 = vadd.f32 %v709, %v725
        %v742 = vrsqrt.pop %v726
        %v743 = vmul.f32 %v742, %v726
        %v744 = vmul.f32 %v743, %v742
        %v745 = vmul.f32 0.5, %v744
        %v746 = vsub.f32 1.5, %v745
        %v747 = vmul.f32 %v742, %v746
        %v748 = vmul.f32 %v726, %v747
        %vm749 = vcmp.eq.f32.partialorder %v726, inf
        %v750 = vsel %vm749, %v726, %v748
        %vm751 = vcmp.eq.f32.partialorder %v726, 0.0
        %v752 = vand.u32 %v726, 2147483648
        %v753 = vsel %vm751, %v752, %v750
        %v754 = vrsqrt.pop %v727
        %v755 = vmul.f32 %v754, %v727
        %v756 = vmul.f32 %v755, %v754
        %v757 = vmul.f32 0.5, %v756
        %v758 = vsub.f32 1.5, %v757
        %v759 = vmul.f32 %v754, %v758
        %v760 = vmul.f32 %v727, %v759
        %vm761 = vcmp.eq.f32.partialorder %v727, inf
        %v762 = vsel %vm761, %v727, %v760
        %vm763 = vcmp.eq.f32.partialorder %v727, 0.0
        %v764 = vand.u32 %v727, 2147483648
        %v765 = vsel %vm763, %v764, %v762
        %v766 = vrsqrt.pop %v728
        %v767 = vmul.f32 %v766, %v728
        %v768 = vmul.f32 %v767, %v766
        %v769 = vmul.f32 0.5, %v768
        %v770 = vsub.f32 1.5, %v769
        %v771 = vmul.f32 %v766, %v770
        %v772 = vmul.f32 %v728, %v771
        %vm773 = vcmp.eq.f32.partialorder %v728, inf
        %v774 = vsel %vm773, %v728, %v772
        %vm775 = vcmp.eq.f32.partialorder %v728, 0.0
        %v776 = vand.u32 %v728, 2147483648
        %v777 = vsel %vm775, %v776, %v774
        %v778 = vrsqrt.pop %v729
        %v779 = vmul.f32 %v778, %v729
        %v780 = vmul.f32 %v779, %v778
        %v781 = vmul.f32 0.5, %v780
        %v782 = vsub.f32 1.5, %v781
        %v783 = vmul.f32 %v778, %v782
        %v784 = vmul.f32 %v729, %v783
        %vm785 = vcmp.eq.f32.partialorder %v729, inf
        %v786 = vsel %vm785, %v729, %v784
        %vm787 = vcmp.eq.f32.partialorder %v729, 0.0
        %v788 = vand.u32 %v729, 2147483648
        %v789 = vsel %vm787, %v788, %v786
        %v790 = vrsqrt.pop %v730
        %v791 = vmul.f32 %v790, %v730
        %v792 = vmul.f32 %v791, %v790
        %v793 = vmul.f32 0.5, %v792
        %v794 = vsub.f32 1.5, %v793
        %v795 = vmul.f32 %v790, %v794
        %v796 = vmul.f32 %v730, %v795
        %vm797 = vcmp.eq.f32.partialorder %v730, inf
        %v798 = vsel %vm797, %v730, %v796
        %vm799 = vcmp.eq.f32.partialorder %v730, 0.0
        %v800 = vand.u32 %v730, 2147483648
        %v801 = vsel %vm799, %v800, %v798
        %v802 = vrsqrt.pop %v731
        %v803 = vmul.f32 %v802, %v731
        %v804 = vmul.f32 %v803, %v802
        %v805 = vmul.f32 0.5, %v804
        %v806 = vsub.f32 1.5, %v805
        %v807 = vmul.f32 %v802, %v806
        %v808 = vmul.f32 %v731, %v807
        %vm809 = vcmp.eq.f32.partialorder %v731, inf
        %v810 = vsel %vm809, %v731, %v808
        %vm811 = vcmp.eq.f32.partialorder %v731, 0.0
        %v812 = vand.u32 %v731, 2147483648
        %v813 = vsel %vm811, %v812, %v810
        %v814 = vrsqrt.pop %v732
        %v815 = vmul.f32 %v814, %v732
        %v816 = vmul.f32 %v815, %v814
        %v817 = vmul.f32 0.5, %v816
        %v818 = vsub.f32 1.5, %v817
        %v819 = vmul.f32 %v814, %v818
        %v820 = vmul.f32 %v732, %v819
        %vm821 = vcmp.eq.f32.partialorder %v732, inf
        %v822 = vsel %vm821, %v732, %v820
        %vm823 = vcmp.eq.f32.partialorder %v732, 0.0
        %v824 = vand.u32 %v732, 2147483648
        %v825 = vsel %vm823, %v824, %v822
        %v826 = vrsqrt.pop %v733
        %v827 = vmul.f32 %v826, %v733
        %v828 = vmul.f32 %v827, %v826
        %v829 = vmul.f32 0.5, %v828
        %v830 = vsub.f32 1.5, %v829
        %v831 = vmul.f32 %v826, %v830
        %v832 = vmul.f32 %v733, %v831
        %vm833 = vcmp.eq.f32.partialorder %v733, inf
        %v834 = vsel %vm833, %v733, %v832
        %vm835 = vcmp.eq.f32.partialorder %v733, 0.0
        %v836 = vand.u32 %v733, 2147483648
        %v837 = vsel %vm835, %v836, %v834
        %v838 = vrsqrt.pop %v734
        %v839 = vmul.f32 %v838, %v734
        %v840 = vmul.f32 %v839, %v838
        %v841 = vmul.f32 0.5, %v840
        %v842 = vsub.f32 1.5, %v841
        %v843 = vmul.f32 %v838, %v842
        %v844 = vmul.f32 %v734, %v843
        %vm845 = vcmp.eq.f32.partialorder %v734, inf
        %v846 = vsel %vm845, %v734, %v844
        %vm847 = vcmp.eq.f32.partialorder %v734, 0.0
        %v848 = vand.u32 %v734, 2147483648
        %v849 = vsel %vm847, %v848, %v846
        %v850 = vrsqrt.pop %v735
        %v851 = vmul.f32 %v850, %v735
        %v852 = vmul.f32 %v851, %v850
        %v853 = vmul.f32 0.5, %v852
        %v854 = vsub.f32 1.5, %v853
        %v855 = vmul.f32 %v850, %v854
        %v856 = vmul.f32 %v735, %v855
        %vm857 = vcmp.eq.f32.partialorder %v735, inf
        %v858 = vsel %vm857, %v735, %v856
        %vm859 = vcmp.eq.f32.partialorder %v735, 0.0
        %v860 = vand.u32 %v735, 2147483648
        %v861 = vsel %vm859, %v860, %v858
        %v862 = vrsqrt.pop %v736
        %v863 = vmul.f32 %v862, %v736
        %v864 = vmul.f32 %v863, %v862
        %v865 = vmul.f32 0.5, %v864
        %v866 = vsub.f32 1.5, %v865
        %v867 = vmul.f32 %v862, %v866
        %v868 = vmul.f32 %v736, %v867
        %vm869 = vcmp.eq.f32.partialorder %v736, inf
        %v870 = vsel %vm869, %v736, %v868
        %vm871 = vcmp.eq.f32.partialorder %v736, 0.0
        %v872 = vand.u32 %v736, 2147483648
        %v873 = vsel %vm871, %v872, %v870
        %v874 = vrsqrt.pop %v737
        %v875 = vmul.f32 %v874, %v737
        %v876 = vmul.f32 %v875, %v874
        %v877 = vmul.f32 0.5, %v876
        %v878 = vsub.f32 1.5, %v877
        %v879 = vmul.f32 %v874, %v878
        %v880 = vmul.f32 %v737, %v879
        %vm881 = vcmp.eq.f32.partialorder %v737, inf
        %v882 = vsel %vm881, %v737, %v880
        %vm883 = vcmp.eq.f32.partialorder %v737, 0.0
        %v884 = vand.u32 %v737, 2147483648
        %v885 = vsel %vm883, %v884, %v882
        %v886 = vrsqrt.pop %v738
        %v887 = vmul.f32 %v886, %v738
        %v888 = vmul.f32 %v887, %v886
        %v889 = vmul.f32 0.5, %v888
        %v890 = vsub.f32 1.5, %v889
        %v891 = vmul.f32 %v886, %v890
        %v892 = vmul.f32 %v738, %v891
        %vm893 = vcmp.eq.f32.partialorder %v738, inf
        %v894 = vsel %vm893, %v738, %v892
        %vm895 = vcmp.eq.f32.partialorder %v738, 0.0
        %v896 = vand.u32 %v738, 2147483648
        %v897 = vsel %vm895, %v896, %v894
        %v898 = vrsqrt.pop %v739
        %v899 = vmul.f32 %v898, %v739
        %v900 = vmul.f32 %v899, %v898
        %v901 = vmul.f32 0.5, %v900
        %v902 = vsub.f32 1.5, %v901
        %v903 = vmul.f32 %v898, %v902
        %v904 = vmul.f32 %v739, %v903
        %vm905 = vcmp.eq.f32.partialorder %v739, inf
        %v906 = vsel %vm905, %v739, %v904
        %vm907 = vcmp.eq.f32.partialorder %v739, 0.0
        %v908 = vand.u32 %v739, 2147483648
        %v909 = vsel %vm907, %v908, %v906
        %v910 = vrsqrt.pop %v740
        %v911 = vmul.f32 %v910, %v740
        %v912 = vmul.f32 %v911, %v910
        %v913 = vmul.f32 0.5, %v912
        %v914 = vsub.f32 1.5, %v913
        %v915 = vmul.f32 %v910, %v914
        %v916 = vmul.f32 %v740, %v915
        %vm917 = vcmp.eq.f32.partialorder %v740, inf
        %v918 = vsel %vm917, %v740, %v916
        %vm919 = vcmp.eq.f32.partialorder %v740, 0.0
        %v920 = vand.u32 %v740, 2147483648
        %v921 = vsel %vm919, %v920, %v918
        %v922 = vrsqrt.pop %v741
        %v923 = vmul.f32 %v922, %v741
        %v924 = vmul.f32 %v923, %v922
        %v925 = vmul.f32 0.5, %v924
        %v926 = vsub.f32 1.5, %v925
        %v927 = vmul.f32 %v922, %v926
        %v928 = vmul.f32 %v741, %v927
        %vm929 = vcmp.eq.f32.partialorder %v741, inf
        %v930 = vsel %vm929, %v741, %v928
        %vm931 = vcmp.eq.f32.partialorder %v741, 0.0
        %v932 = vand.u32 %v741, 2147483648
        %v933 = vsel %vm931, %v932, %v930
        %v934 = vadd.f32 %v753, 1e-06
        %v935 = vadd.f32 %v765, 1e-06
        %v936 = vadd.f32 %v777, 1e-06
        %v937 = vadd.f32 %v789, 1e-06
        %v938 = vadd.f32 %v801, 1e-06
        %v939 = vadd.f32 %v813, 1e-06
        %v940 = vadd.f32 %v825, 1e-06
        %v941 = vadd.f32 %v837, 1e-06
        %v942 = vadd.f32 %v849, 1e-06
        %v943 = vadd.f32 %v861, 1e-06
        %v944 = vadd.f32 %v873, 1e-06
        %v945 = vadd.f32 %v885, 1e-06
        %v946 = vadd.f32 %v897, 1e-06
        %v947 = vadd.f32 %v909, 1e-06
        %v948 = vadd.f32 %v921, 1e-06
        %v949 = vadd.f32 %v933, 1e-06
        %v950 = vlog2.pop %v934
        %v951 = vmul.f32 %v950, 0.6931472
        %v952 = vlog2.pop %v935
        %v953 = vmul.f32 %v952, 0.6931472
        %v954 = vlog2.pop %v936
        %v955 = vmul.f32 %v954, 0.6931472
        %v956 = vlog2.pop %v937
        %v957 = vmul.f32 %v956, 0.6931472
        %v958 = vlog2.pop %v938
        %v959 = vmul.f32 %v958, 0.6931472
        %v960 = vlog2.pop %v939
        %v961 = vmul.f32 %v960, 0.6931472
        %v962 = vlog2.pop %v940
        %v963 = vmul.f32 %v962, 0.6931472
        %v964 = vlog2.pop %v941
        %v965 = vmul.f32 %v964, 0.6931472
        %v966 = vlog2.pop %v942
        %v967 = vmul.f32 %v966, 0.6931472
        %v968 = vlog2.pop %v943
        %v969 = vmul.f32 %v968, 0.6931472
        %v970 = vlog2.pop %v944
        %v971 = vmul.f32 %v970, 0.6931472
        %v972 = vlog2.pop %v945
        %v973 = vmul.f32 %v972, 0.6931472
        %v974 = vlog2.pop %v946
        %v975 = vmul.f32 %v974, 0.6931472
        %v976 = vlog2.pop %v947
        %v977 = vmul.f32 %v976, 0.6931472
        %v978 = vlog2.pop %v948
        %v979 = vmul.f32 %v978, 0.6931472
        %v980 = vlog2.pop %v949
        %v981 = vmul.f32 %v980, 0.6931472
        %v982 = vld [vmem:[%s3] sm:$0xff]
        %v983 = vld [vmem:[%s3 + $0x8] sm:$0xff]
        %v984 = vld [vmem:[%s3 + $0x10] sm:$0xff]
        %v985 = vld [vmem:[%s3 + $0x18] sm:$0xff]
        %v986 = vld [vmem:[%s3 + $0x20] sm:$0xff]
        %v987 = vld [vmem:[%s3 + $0x28] sm:$0xff]
        %v988 = vld [vmem:[%s3 + $0x30] sm:$0xff]
        %v989 = vld [vmem:[%s3 + $0x38] sm:$0xff]
        %v990 = vld [vmem:[%s3 + $0x40] sm:$0xff]
        %v991 = vld [vmem:[%s3 + $0x48] sm:$0xff]
        %v992 = vld [vmem:[%s3 + $0x50] sm:$0xff]
        %v993 = vld [vmem:[%s3 + $0x58] sm:$0xff]
        %v994 = vld [vmem:[%s3 + $0x60] sm:$0xff]
        %v995 = vld [vmem:[%s3 + $0x68] sm:$0xff]
        %v996 = vld [vmem:[%s3 + $0x70] sm:$0xff]
        %v997 = vld [vmem:[%s3 + $0x78] sm:$0xff]
        %v998 = vld [vmem:[%s4] sm:$0x1]
        %v1000 = vperm.slane %v998, 0
        %1002 = vmatpush.msra.mxu0 %v997
        %1003 = vmatpush.msra.mxu0 %v996
        %1004 = vmatpush.msra.mxu0 %v995
        %1005 = vmatpush.msra.mxu0 %v994
        %1006 = vmatpush.msra.mxu0 %v993
        %1007 = vmatpush.msra.mxu0 %v992
        %1008 = vmatpush.msra.mxu0 %v991
        %1009 = vmatpush.msra.mxu0 %v990
        %1010 = vmatpush.msra.mxu0 %v989
        %1011 = vmatpush.msra.mxu0 %v988
        %1012 = vmatpush.msra.mxu0 %v987
        %1013 = vmatpush.msra.mxu0 %v986
        %1014 = vmatpush.msra.mxu0 %v985
        %1015 = vmatpush.msra.mxu0 %v984
        %1016 = vmatpush.msra.mxu0 %v983
        %1017 = vmatpush.msra.mxu0 %v982
        %1018 = vmatmul.f32.gmra.mxu0 %v951
        %v1019 = vpop.f32.mrf.mxu0
        %v1020 = vadd.f32 %v1000, %v1019
        %1021 = vmatmul.f32.gmra.mxu0 %v953
        %v1022 = vpop.f32.mrf.mxu0
        %v1023 = vadd.f32 %v1000, %v1022
        %1024 = vmatmul.f32.gmra.mxu0 %v955
        %v1025 = vpop.f32.mrf.mxu0
        %v1026 = vadd.f32 %v1000, %v1025
        %1027 = vmatmul.f32.gmra.mxu0 %v957
        %v1028 = vpop.f32.mrf.mxu0
        %v1029 = vadd.f32 %v1000, %v1028
        %1030 = vmatmul.f32.gmra.mxu0 %v959
        %v1031 = vpop.f32.mrf.mxu0
        %v1032 = vadd.f32 %v1000, %v1031
        %1033 = vmatmul.f32.gmra.mxu0 %v961
        %v1034 = vpop.f32.mrf.mxu0
        %v1035 = vadd.f32 %v1000, %v1034
        %1036 = vmatmul.f32.gmra.mxu0 %v963
        %v1037 = vpop.f32.mrf.mxu0
        %v1038 = vadd.f32 %v1000, %v1037
        %1039 = vmatmul.f32.gmra.mxu0 %v965
        %v1040 = vpop.f32.mrf.mxu0
        %v1041 = vadd.f32 %v1000, %v1040
        %1042 = vmatmul.f32.gmra.mxu0 %v967
        %v1043 = vpop.f32.mrf.mxu0
        %v1044 = vadd.f32 %v1000, %v1043
        %1045 = vmatmul.f32.gmra.mxu0 %v969
        %v1046 = vpop.f32.mrf.mxu0
        %v1047 = vadd.f32 %v1000, %v1046
        %1048 = vmatmul.f32.gmra.mxu0 %v971
        %v1049 = vpop.f32.mrf.mxu0
        %v1050 = vadd.f32 %v1000, %v1049
        %1051 = vmatmul.f32.gmra.mxu0 %v973
        %v1052 = vpop.f32.mrf.mxu0
        %v1053 = vadd.f32 %v1000, %v1052
        %1054 = vmatmul.f32.gmra.mxu0 %v975
        %v1055 = vpop.f32.mrf.mxu0
        %v1056 = vadd.f32 %v1000, %v1055
        %1057 = vmatmul.f32.gmra.mxu0 %v977
        %v1058 = vpop.f32.mrf.mxu0
        %v1059 = vadd.f32 %v1000, %v1058
        %1060 = vmatmul.f32.gmra.mxu0 %v979
        %v1061 = vpop.f32.mrf.mxu0
        %v1062 = vadd.f32 %v1000, %v1061
        %1063 = vmatmul.f32.gmra.mxu0 %v981
        %v1064 = vpop.f32.mrf.mxu0
        %v1065 = vadd.f32 %v1000, %v1064
        %1066 = vdwg.mxu0
        %v1067 = vmax.f32 %v1020, 0.0
        %v1068 = vmax.f32 %v1023, 0.0
        %v1069 = vmax.f32 %v1026, 0.0
        %v1070 = vmax.f32 %v1029, 0.0
        %v1071 = vmax.f32 %v1032, 0.0
        %v1072 = vmax.f32 %v1035, 0.0
        %v1073 = vmax.f32 %v1038, 0.0
        %v1074 = vmax.f32 %v1041, 0.0
        %v1075 = vmax.f32 %v1044, 0.0
        %v1076 = vmax.f32 %v1047, 0.0
        %v1077 = vmax.f32 %v1050, 0.0
        %v1078 = vmax.f32 %v1053, 0.0
        %v1079 = vmax.f32 %v1056, 0.0
        %v1080 = vmax.f32 %v1059, 0.0
        %v1081 = vmax.f32 %v1062, 0.0
        %v1082 = vmax.f32 %v1065, 0.0
        %v1083 = vld [vmem:[%s5] sm:$0xff]
        %v1084 = vld [vmem:[%s5 + $0x8] sm:$0xff]
        %v1085 = vld [vmem:[%s5 + $0x10] sm:$0xff]
        %v1086 = vld [vmem:[%s5 + $0x18] sm:$0xff]
        %v1087 = vld [vmem:[%s6] sm:$0x1]
        %v1089 = vperm.slane %v1087, 0
        %vm1091 = vcmask 261120
        %v1093 = vsel %vm1091, %v1067, 0
        %v1096 = vsel %vm1091, %v1068, 0
        %v1099 = vsel %vm1091, %v1069, 0
        %v1102 = vsel %vm1091, %v1070, 0
        %v1105 = vsel %vm1091, %v1071, 0
        %v1108 = vsel %vm1091, %v1072, 0
        %v1111 = vsel %vm1091, %v1073, 0
        %v1114 = vsel %vm1091, %v1074, 0
        %v1117 = vsel %vm1091, %v1075, 0
        %v1120 = vsel %vm1091, %v1076, 0
        %v1123 = vsel %vm1091, %v1077, 0
        %v1126 = vsel %vm1091, %v1078, 0
        %v1129 = vsel %vm1091, %v1079, 0
        %v1132 = vsel %vm1091, %v1080, 0
        %v1135 = vsel %vm1091, %v1081, 0
        %v1138 = vsel %vm1091, %v1082, 0
        %1140 = vmatpush.msra.mxu0 0.0
        %1141 = vmatpush.msra.mxu0 0.0
        %1142 = vmatpush.msra.mxu0 0.0
        %1143 = vmatpush.msra.mxu0 0.0
        %1144 = vmatpush.msra.mxu0 0.0
        %1145 = vmatpush.msra.mxu0 0.0
        %1146 = vmatpush.msra.mxu0 0.0
        %1147 = vmatpush.msra.mxu0 0.0
        %1148 = vmatpush.msra.mxu0 0.0
        %1149 = vmatpush.msra.mxu0 0.0
        %1150 = vmatpush.msra.mxu0 0.0
        %1151 = vmatpush.msra.mxu0 0.0
        %1152 = vmatpush.msra.mxu0 %v1086
        %1153 = vmatpush.msra.mxu0 %v1085
        %1154 = vmatpush.msra.mxu0 %v1084
        %1155 = vmatpush.msra.mxu0 %v1083
        %1156 = vmatmul.f32.gmra.mxu0 %v1093
        %v1157 = vpop.f32.mrf.mxu0
        %v1158 = vadd.f32 %v1089, %v1157
        %1159 = vmatmul.f32.gmra.mxu0 %v1096
        %v1160 = vpop.f32.mrf.mxu0
        %v1161 = vadd.f32 %v1089, %v1160
        %1162 = vmatmul.f32.gmra.mxu0 %v1099
        %v1163 = vpop.f32.mrf.mxu0
        %v1164 = vadd.f32 %v1089, %v1163
        %1165 = vmatmul.f32.gmra.mxu0 %v1102
        %v1166 = vpop.f32.mrf.mxu0
        %v1167 = vadd.f32 %v1089, %v1166
        %1168 = vmatmul.f32.gmra.mxu0 %v1105
        %v1169 = vpop.f32.mrf.mxu0
        %v1170 = vadd.f32 %v1089, %v1169
        %1171 = vmatmul.f32.gmra.mxu0 %v1108
        %v1172 = vpop.f32.mrf.mxu0
        %v1173 = vadd.f32 %v1089, %v1172
        %1174 = vmatmul.f32.gmra.mxu0 %v1111
        %v1175 = vpop.f32.mrf.mxu0
        %v1176 = vadd.f32 %v1089, %v1175
        %1177 = vmatmul.f32.gmra.mxu0 %v1114
        %v1178 = vpop.f32.mrf.mxu0
        %v1179 = vadd.f32 %v1089, %v1178
        %1180 = vmatmul.f32.gmra.mxu0 %v1117
        %v1181 = vpop.f32.mrf.mxu0
        %v1182 = vadd.f32 %v1089, %v1181
        %1183 = vmatmul.f32.gmra.mxu0 %v1120
        %v1184 = vpop.f32.mrf.mxu0
        %v1185 = vadd.f32 %v1089, %v1184
        %1186 = vmatmul.f32.gmra.mxu0 %v1123
        %v1187 = vpop.f32.mrf.mxu0
        %v1188 = vadd.f32 %v1089, %v1187
        %1189 = vmatmul.f32.gmra.mxu0 %v1126
        %v1190 = vpop.f32.mrf.mxu0
        %v1191 = vadd.f32 %v1089, %v1190
        %1192 = vmatmul.f32.gmra.mxu0 %v1129
        %v1193 = vpop.f32.mrf.mxu0
        %v1194 = vadd.f32 %v1089, %v1193
        %1195 = vmatmul.f32.gmra.mxu0 %v1132
        %v1196 = vpop.f32.mrf.mxu0
        %v1197 = vadd.f32 %v1089, %v1196
        %1198 = vmatmul.f32.gmra.mxu0 %v1135
        %v1199 = vpop.f32.mrf.mxu0
        %v1200 = vadd.f32 %v1089, %v1199
        %1201 = vmatmul.f32.gmra.mxu0 %v1138
        %v1202 = vpop.f32.mrf.mxu0
        %v1203 = vadd.f32 %v1089, %v1202
        %1204 = vdwg.mxu0
        %v1205 = vsub.f32 0.0, %v1158
        %v1206 = vsub.f32 0.0, %v1161
        %v1207 = vsub.f32 0.0, %v1164
        %v1208 = vsub.f32 0.0, %v1167
        %v1209 = vsub.f32 0.0, %v1170
        %v1210 = vsub.f32 0.0, %v1173
        %v1211 = vsub.f32 0.0, %v1176
        %v1212 = vsub.f32 0.0, %v1179
        %v1213 = vsub.f32 0.0, %v1182
        %v1214 = vsub.f32 0.0, %v1185
        %v1215 = vsub.f32 0.0, %v1188
        %v1216 = vsub.f32 0.0, %v1191
        %v1217 = vsub.f32 0.0, %v1194
        %v1218 = vsub.f32 0.0, %v1197
        %v1219 = vsub.f32 0.0, %v1200
        %v1220 = vsub.f32 0.0, %v1203
        %v1221 = vmul.f32 %v1205, 1.442695
        %v1222 = vpow.pop %v1221
        %v1223 = vmul.f32 %v1206, 1.442695
        %v1224 = vpow.pop %v1223
        %v1225 = vmul.f32 %v1207, 1.442695
        %v1226 = vpow.pop %v1225
        %v1227 = vmul.f32 %v1208, 1.442695
        %v1228 = vpow.pop %v1227
        %v1229 = vmul.f32 %v1209, 1.442695
        %v1230 = vpow.pop %v1229
        %v1231 = vmul.f32 %v1210, 1.442695
        %v1232 = vpow.pop %v1231
        %v1233 = vmul.f32 %v1211, 1.442695
        %v1234 = vpow.pop %v1233
        %v1235 = vmul.f32 %v1212, 1.442695
        %v1236 = vpow.pop %v1235
        %v1237 = vmul.f32 %v1213, 1.442695
        %v1238 = vpow.pop %v1237
        %v1239 = vmul.f32 %v1214, 1.442695
        %v1240 = vpow.pop %v1239
        %v1241 = vmul.f32 %v1215, 1.442695
        %v1242 = vpow.pop %v1241
        %v1243 = vmul.f32 %v1216, 1.442695
        %v1244 = vpow.pop %v1243
        %v1245 = vmul.f32 %v1217, 1.442695
        %v1246 = vpow.pop %v1245
        %v1247 = vmul.f32 %v1218, 1.442695
        %v1248 = vpow.pop %v1247
        %v1249 = vmul.f32 %v1219, 1.442695
        %v1250 = vpow.pop %v1249
        %v1251 = vmul.f32 %v1220, 1.442695
        %v1252 = vpow.pop %v1251
        %v1253 = vadd.f32 %v1222, 1.0
        %v1254 = vadd.f32 %v1224, 1.0
        %v1255 = vadd.f32 %v1226, 1.0
        %v1256 = vadd.f32 %v1228, 1.0
        %v1257 = vadd.f32 %v1230, 1.0
        %v1258 = vadd.f32 %v1232, 1.0
        %v1259 = vadd.f32 %v1234, 1.0
        %v1260 = vadd.f32 %v1236, 1.0
        %v1261 = vadd.f32 %v1238, 1.0
        %v1262 = vadd.f32 %v1240, 1.0
        %v1263 = vadd.f32 %v1242, 1.0
        %v1264 = vadd.f32 %v1244, 1.0
        %v1265 = vadd.f32 %v1246, 1.0
        %v1266 = vadd.f32 %v1248, 1.0
        %v1267 = vadd.f32 %v1250, 1.0
        %v1268 = vadd.f32 %v1252, 1.0
        %v1269 = vrcp.pop %v1253
        %v1270 = vrcp.pop %v1254
        %v1271 = vrcp.pop %v1255
        %v1272 = vrcp.pop %v1256
        %v1273 = vrcp.pop %v1257
        %v1274 = vrcp.pop %v1258
        %v1275 = vrcp.pop %v1259
        %v1276 = vrcp.pop %v1260
        %v1277 = vrcp.pop %v1261
        %v1278 = vrcp.pop %v1262
        %v1279 = vrcp.pop %v1263
        %v1280 = vrcp.pop %v1264
        %v1281 = vrcp.pop %v1265
        %v1282 = vrcp.pop %v1266
        %v1283 = vrcp.pop %v1267
        %v1284 = vrcp.pop %v1268
        %1285 = vxpose.xlu0.b32.start [1/16] %v1269, 128
        %1286 = vxpose.xlu0.b32.cont [2/16] %v1270, 128
        %1287 = vxpose.xlu0.b32.cont [3/16] %v1271, 128
        %1288 = vxpose.xlu0.b32.cont [4/16] %v1272, 128
        %1289 = vxpose.xlu0.b32.cont [5/16] %v1273, 128
        %1290 = vxpose.xlu0.b32.cont [6/16] %v1274, 128
        %1291 = vxpose.xlu0.b32.cont [7/16] %v1275, 128
        %1292 = vxpose.xlu0.b32.cont [8/16] %v1276, 128
        %1293 = vxpose.xlu0.b32.cont [9/16] %v1277, 128
        %1294 = vxpose.xlu0.b32.cont [10/16] %v1278, 128
        %1295 = vxpose.xlu0.b32.cont [11/16] %v1279, 128
        %1296 = vxpose.xlu0.b32.cont [12/16] %v1280, 128
        %1297 = vxpose.xlu0.b32.cont [13/16] %v1281, 128
        %1298 = vxpose.xlu0.b32.cont [14/16] %v1282, 128
        %1299 = vxpose.xlu0.b32.cont [15/16] %v1283, 128
        %1300 = vxpose.xlu0.b32.end [16/16] %v1284, 128
        %v1301 = vpop.trf.xlu0
        %v1302 = vpop.trf.xlu0
        %v1303 = vpop.trf.xlu0
        %v1304 = vpop.trf.xlu0
        %v1305 = vpop.trf.xlu0
        %v1306 = vpop.trf.xlu0
        %v1307 = vpop.trf.xlu0
        %v1308 = vpop.trf.xlu0
        %v1309 = vpop.trf.xlu0
        %v1310 = vpop.trf.xlu0
        %v1311 = vpop.trf.xlu0
        %v1312 = vpop.trf.xlu0
        %v1313 = vpop.trf.xlu0
        %v1314 = vpop.trf.xlu0
        %v1315 = vpop.trf.xlu0
        %v1316 = vpop.trf.xlu0
        %1317 = vst [vmem:[%s284] sm:$0xff] %v1301
        %1318 = vst [vmem:[%s284 + $0x8] sm:$0xff] %v1302
        %1319 = vst [vmem:[%s284 + $0x10] sm:$0xff] %v1303
        %1320 = vst [vmem:[%s284 + $0x18] sm:$0xff] %v1304
        %1321 = vst [vmem:[%s284 + $0x20] sm:$0xff] %v1305
        %s1322 = sand.u32 %s183, 1
        %s1323 = sand.u32 %s183, 1
        %s1324 = smul.addr %s1323, 40
        %s1325 = scalar_lea.vmem [#allocation2], %s1324
        // Predicated region
        $region49: #{_pipeline.1} parent=47 // pred_check
          %p1326 = pneg %p193
        $region50: #{_pipeline.1} parent=47 // pred_check_branch
          %1328 = sbr.rel (%p1326) target = $region52
        $region51: #{_pipeline.1} parent=47 // pred_region
          %s1329 = smul.addr %s18, 8
          %s1330 = scalar_lea.vmem %s7, %s1329
          // Predicated region
          $region53: #{_pipeline.1} parent=51 // pred_check
            _
          $region54: #{_pipeline.1} parent=51 // pred_check_branch
            %1332 = sbr.rel (0) target = $region56
          $region55: #{_pipeline.1} parent=51 // pred_region
            // Predicated region
            $region57: #{_pipeline.1} parent=55 // pred_check
              _
            $region58: #{_pipeline.1} parent=55 // pred_check_branch
              %1334 = sbr.rel (0) target = $region60
            $region59: #{_pipeline.1} parent=55 // pred_region
              // Predicated region
              $region72: #{_pipeline.1} parent=59 // pred_check
                _
              $region73: #{_pipeline.1} parent=59 // pred_check_branch
                %1358 = sbr.rel (0) target = $region75
              $region74: #{_pipeline.1} parent=59 // pred_region
                loop: start=0, step=1, limit=1
                $region76: #{_pipeline.1} parent=74 // loop_pre_header
                  _
                $region77: #{_pipeline.1} parent=74 // loop_header
                  %s1360 = sphi 0, %s1364
                  %p1361 = scmp.ge.s32.totalorder %s1360, 1
                  %s1365 = sphi %s1325, %s1325
                  %s1366 = sphi %s1330, %s1330
                $region78: #{_pipeline.1} parent=74 // loop_header_branch
                  %1363 = sbr.rel (%p1361) target = $region82
                $region79: #{_pipeline.1} parent=74 // loop_body
                  %v1367 = vld [vmem:[%s1365] sm:$0xff]
                  %1368 = vst [vmem:[%s1366] sm:$0xff] %v1367
                  %v1369 = vld [vmem:[%s1365 + $0x8] sm:$0xff]
                  %1370 = vst [vmem:[%s1366 + $0x10] sm:$0xff] %v1369
                  %v1371 = vld [vmem:[%s1365 + $0x10] sm:$0xff]
                  %1372 = vst [vmem:[%s1366 + $0x20] sm:$0xff] %v1371
                  %v1373 = vld [vmem:[%s1365 + $0x18] sm:$0xff]
                  %1374 = vst [vmem:[%s1366 + $0x30] sm:$0xff] %v1373
                  %v1375 = vld [vmem:[%s1365 + $0x20] sm:$0xff]
                  %1376 = vst [vmem:[%s1366 + $0x40] sm:$0xff] %v1375
                $region80: #{_pipeline.1} parent=74 // loop_footer
                  %s1364 = sadd.s32 1, %s1360
                $region81: #{_pipeline.1} parent=74 // loop_footer_branch
                  %1359 = sbr.rel target = $region77
                $region82: #{_pipeline.1} parent=74 // loop_exit
                  _
              $region75: #{_pipeline.1} parent=59 // pred_fallthru
                _
              // Predicated region
              $region83: #{_pipeline.1} parent=59 // pred_check
                _
              $region84: #{_pipeline.1} parent=59 // pred_check_branch
                %1378 = sbr.rel target = $region86
              $region85: #{_pipeline.1} parent=59 // pred_region
                _
              $region86: #{_pipeline.1} parent=59 // pred_fallthru
                _
            $region60: #{_pipeline.1} parent=55 // pred_fallthru
              _
            // Predicated region
            $region61: #{_pipeline.1} parent=55 // pred_check
              _
            $region62: #{_pipeline.1} parent=55 // pred_check_branch
              %1336 = sbr.rel target = $region64
            $region63: #{_pipeline.1} parent=55 // pred_region
              %s1338 = ssub.s32 256, 1
              loop: start=0, step=1, limit=1
              $region65: #{_pipeline.1} parent=63 // loop_pre_header
                _
              $region66: #{_pipeline.1} parent=63 // loop_header
                %s1340 = sphi 0, %s1344
                %p1341 = scmp.ge.s32.totalorder %s1340, 1
                %s1345 = sphi %s1325, %s1325
                %s1346 = sphi %s1330, %s1330
              $region67: #{_pipeline.1} parent=63 // loop_header_branch
                %1343 = sbr.rel (%p1341) target = $region71
              $region68: #{_pipeline.1} parent=63 // loop_body
                %v1347 = vld [vmem:[%s1345] sm:%s1338]
                %1348 = vst [vmem:[%s1346] sm:%s1338] %v1347
                %v1349 = vld [vmem:[%s1345 + $0x8] sm:%s1338]
                %1350 = vst [vmem:[%s1346 + $0x10] sm:%s1338] %v1349
                %v1351 = vld [vmem:[%s1345 + $0x10] sm:%s1338]
                %1352 = vst [vmem:[%s1346 + $0x20] sm:%s1338] %v1351
                %v1353 = vld [vmem:[%s1345 + $0x18] sm:%s1338]
                %1354 = vst [vmem:[%s1346 + $0x30] sm:%s1338] %v1353
                %v1355 = vld [vmem:[%s1345 + $0x20] sm:%s1338]
                %1356 = vst [vmem:[%s1346 + $0x40] sm:%s1338] %v1355
              $region69: #{_pipeline.1} parent=63 // loop_footer
                %s1344 = sadd.s32 1, %s1340
              $region70: #{_pipeline.1} parent=63 // loop_footer_branch
                %1339 = sbr.rel target = $region66
              $region71: #{_pipeline.1} parent=63 // loop_exit
                _
            $region64: #{_pipeline.1} parent=55 // pred_fallthru
              _
          $region56: #{_pipeline.1} parent=51 // pred_fallthru
            _
          %1379 = vnop
        $region52: #{_pipeline.1} parent=47 // pred_fallthru
          _
      $region48: #{_pipeline.1} parent=5 // pred_fallthru
        _
      %p1380 = scmp.le.s32.totalorder 2, %s13
      // Predicated region
      $region87: #{_pipeline.1} parent=5 // pred_check
        %p1381 = pneg %p1380
      $region88: #{_pipeline.1} parent=5 // pred_check_branch
        %1383 = sbr.rel (%p1381) target = $region90
      $region89: #{_pipeline.1} parent=5 // pred_region
        %s1384 = ssub.s32 %s13, 2
        // Predicated region
        $region91: #{_pipeline.1} parent=89 // pred_check
          %p1385 = pneg %p199
        $region92: #{_pipeline.1} parent=89 // pred_check_branch
          %1387 = sbr.rel (%p1385) target = $region94
        $region93: #{_pipeline.1} parent=89 // pred_region
          %s1388 = sand.u32 %s184, 1
          %s1389 = sand.u32 %s184, 1
          %s1390 = smul.addr %s1389, 40
          %s1391 = scalar_lea.vmem [#allocation2], %s1390
        $region94: #{_pipeline.1} parent=89 // pred_fallthru
          _
      $region90: #{_pipeline.1} parent=5 // pred_fallthru
        _
    $region6: #{_pipeline.1} parent=1 // loop_footer
      %s17 = sadd.s32 1, %s13
    $region7: #{_pipeline.1} parent=1 // loop_footer_branch
      %12 = sbr.rel target = $region3
    $region8: #{_pipeline.1} parent=1 // loop_exit
      _

</llo_original>
